<compile_context>
chip_gen: v6e
topology: v6e:2x2x1
jax: 0.10.0
libtpu: 0.0.40
codegen_flags: <defaults>
</compile_context>

<pallas_src>
import functools

import jax
import jax.numpy as jnp
from jax.experimental import pallas as pl
from jax.experimental.pallas import tpu as pltpu


def _round_up(x, m):
    return (x + m - 1) // m * m


def _vmem_cap_bytes():
    # ~75% of physical VMEM: ~48 MiB on v7x (64 MiB/TC), ~96 MiB on v5e/v6e
    # (128 MiB).  Conservative fallback if the query is unavailable.
    try:
        cap = int(0.75 * pltpu.get_tpu_info().vmem_capacity_bytes)
    except Exception:
        cap = 48 * 2**20
    return max(cap, 16 * 2**20)


# ------------------------------ Pallas kernel --------------------------------
def _lm_head_kernel(h_ref, w_ref, o_ref):
    # h_ref: (Mp, H)  bf16 — whole hidden activation, VMEM-resident
    #                        (constant block index -> DMA'd from HBM once).
    # w_ref: (H, tv)  bf16 — one vocab tile of W^T; its block index changes only
    #                        on the OUTER grid axis -> each tile streamed once.
    # o_ref: (tm, tv)      — logits tile for (row-tile i, vocab-tile j).
    tm = o_ref.shape[0]
    i = pl.program_id(1)                      # inner (M / row-tile) grid axis
    row = pl.multiple_of(i * tm, tm)
    h = h_ref[pl.ds(row, tm), :]
    o_ref[...] = jnp.dot(
        h, w_ref[...], preferred_element_type=jnp.float32
    ).astype(o_ref.dtype)


@functools.partial(jax.jit, static_argnames=("tile_m", "tile_v", "out_dtype"))
def lm_head_pallas(hidden, w_t, *, tile_m=256, tile_v=1024, out_dtype=jnp.float32):
    """hidden: (M, H) any float dtype; w_t: (H, Vp) bf16, Vp already padded to a
    lane-friendly multiple.  Returns logits (M, Vp) in `out_dtype`."""
    M, H = hidden.shape
    H2, Vp = w_t.shape
    assert H == H2
    assert Vp % 128 == 0, "pre-pad the vocab dim of w_t to a multiple of 128"

    # bf16 operands: halves weight/activation streaming bytes, native MXU rate;
    # accumulation stays f32 via preferred_element_type.
    h = hidden.astype(jnp.bfloat16)

    # Tile sizes: lane-dense vocab tiles, sublane-friendly row tiles; shrink for
    # small problems.  tv must evenly divide the pre-padded Vp.
    tv = min(tile_v, Vp)
    while Vp % tv:
        tv -= 128
    tm = min(tile_m, _round_up(M, 16))        # bf16 sublane pack = 16
    Mp = _round_up(M, tm)
    if Mp != M:
        h = jnp.pad(h, ((0, Mp - M), (0, 0)))

    grid = (Vp // tv, Mp // tm)               # V outer (parallel), M inner

    out_bytes = jnp.dtype(out_dtype).itemsize
    flops = 2 * Mp * H * Vp
    # Actual single-pass traffic: hidden once, weights once, logits once.
    bytes_accessed = Mp * H * 2 + H * Vp * 2 + Mp * Vp * out_bytes

    # Resident hidden + double-buffered weight tile + double-buffered out tile.
    vmem_needed = 2 * Mp * H * 2 + 2 * H * tv * 2 + 2 * tm * tv * out_bytes
    vmem_limit = int(min(_vmem_cap_bytes(), max(int(1.25 * vmem_needed), 16 * 2**20)))

    out = pl.pallas_call(
        _lm_head_kernel,
        out_shape=jax.ShapeDtypeStruct((Mp, Vp), out_dtype),
        grid_spec=pltpu.PrefetchScalarGridSpec(
            num_scalar_prefetch=0,
            grid=grid,
            in_specs=[
                # Whole hidden, constant block index -> fetched once, resident.
                pl.BlockSpec((Mp, H), lambda j, i: (0, 0)),
                # Vocab tile of W^T, changes only with the outer axis j.
                pl.BlockSpec((H, tv), lambda j, i: (0, j)),
            ],
            out_specs=pl.BlockSpec((tm, tv), lambda j, i: (i, j)),
        ),
        compiler_params=pltpu.CompilerParams(
            # V "parallel" so megacore splits vocab tiles (each TC streams half
            # the weights); M "arbitrary" (serial within a core, weights/hidden
            # never re-DMA'd across it).
            dimension_semantics=("parallel", "arbitrary"),
            vmem_limit_bytes=vmem_limit,
        ),
        cost_estimate=pl.CostEstimate(
            flops=flops, transcendentals=0, bytes_accessed=bytes_accessed
        ),
    )(h, w_t)

    # Only the (cheap) M padding is sliced; vocab padding is handled (or kept,
    # padded-vocab convention) by the caller.
    return out[:M] if Mp != M else out


# ------------------------------ model wrapper ---------------------------------
class GPT2LMHeadLikePallas:
    """Minimal stand-in for GPT2LMHeadLikeModel.

    Parameters (deterministic from the provided PRNG key):
      wte:        (vocab_size, n_embd)  token embedding     (base-model stand-in)
      wpe:        (max_pos,    n_embd)  position embedding  (base-model stand-in)
      lm_head_wT: (n_embd, v_padded)    lm_head.weight, pre-transposed, bf16,
                                        vocab-padded once at init.
    """

    def __init__(self, vocab_size, n_embd, max_pos, key, tile_v=1024):
        k1, k2, k3 = jax.random.split(key, 3)
        self.vocab_size = vocab_size
        self.n_embd = n_embd
        self.wte = jax.random.normal(k1, (vocab_size, n_embd), jnp.float32) * 0.02
        self.wpe = jax.random.normal(k2, (max_pos, n_embd), jnp.float32) * 0.02

        # nn.Linear(n_embd, vocab, bias=False).weight has shape (V, H); store its
        # transpose, bf16-cast and zero-padded to a tile_v multiple ONCE here so
        # no per-call pad/cast reads the full weight in HBM.
        w = jax.random.normal(k3, (vocab_size, n_embd), jnp.float32) * 0.02
        self.tile_v = min(tile_v, _round_up(vocab_size, 128))
        self.v_padded = _round_up(vocab_size, self.tile_v)
        w_t = w.T.astype(jnp.bfloat16)                    # (H, V)
        if self.v_padded != vocab_size:
            w_t = jnp.pad(w_t, ((0, 0), (0, self.v_padded - vocab_size)))
        self.lm_head_wT = w_t                             # (H, Vp) bf16

    def __call__(self, input_ids, attention_mask=None):
        # input_ids: (B, S) int32.  attention_mask accepted but unused by the
        # simplified embedding-sum base model (see TODO at top of file).
        B, S = input_ids.shape
        positions = jnp.arange(S, dtype=jnp.int32)
        hidden = self.wte[input_ids] + self.wpe[positions][None, :, :]   # (B,S,H)
        hidden_2d = hidden.reshape(B * S, self.n_embd)                   # (M,H)
        logits_2d = lm_head_pallas(
            hidden_2d, self.lm_head_wT, tile_v=self.tile_v
        )                                                                # (M,Vp)
        logits = logits_2d.reshape(B, S, self.v_padded)
        if self.v_padded != self.vocab_size:
            # TODO(synk): adopt a padded-vocab convention downstream to avoid
            #             this slice/copy; padded columns are exact zeros.
            logits = logits[..., : self.vocab_size]
        return logits                                                    # (B,S,V)


# ----------------------------------- main --------------------------------------
if __name__ == "__main__":
    key = jax.random.PRNGKey(0)
    k_model, k_ids = jax.random.split(key)

    batch, seq = 2, 8
    vocab_size, n_embd, max_pos = 256, 32, 64

    model = GPT2LMHeadLikePallas(vocab_size, n_embd, max_pos, k_model)

    input_ids = jax.random.randint(k_ids, (batch, seq), 0, vocab_size, jnp.int32)
    attention_mask = jnp.ones((batch, seq), jnp.int32)

    logits = model(input_ids, attention_mask=attention_mask)
    logits = jax.block_until_ready(logits)

    # Correctness check against a plain-JAX reference at matching precision
    # (bf16 operands, f32 accumulation).  Note for downstream consumers: logits
    # differ slightly from a pure-f32 PyTorch reference due to bf16 streaming.
    hidden = model.wte[input_ids] + model.wpe[jnp.arange(seq)][None, :, :]
    hidden_bf16 = hidden.astype(jnp.bfloat16).astype(jnp.float32)
    w_f32 = model.lm_head_wT.astype(jnp.float32)[:, :vocab_size]
    ref = jnp.einsum("bsh,hv->bsv", hidden_bf16, w_f32)

    assert logits.shape == (batch, seq, vocab_size)
    assert logits.dtype == jnp.float32
    assert jnp.allclose(logits, ref, atol=1e-4, rtol=1e-2)

    print("KERNEL_OK")
</pallas_src>

<mosaic_0001>
module attributes {stable_mosaic.version = 11 : i64} {
  func.func @_lm_head_kernel(%arg0: i32, %arg1: i32, %arg2: memref<16x32xbf16, #tpu.memory_space<vmem>>, %arg3: memref<32x256xbf16, #tpu.memory_space<vmem>>, %arg4: memref<16x256xf32, #tpu.memory_space<vmem>>) attributes {dimension_semantics = [#tpu.dimension_semantics<parallel>, #tpu.dimension_semantics<arbitrary>], iteration_bounds = array<i64: 1, 1>, scalar_prefetch = 0 : i64, scratch_operands = 0 : i64, tpu.core_type = #tpu.core_type<tc>, window_params = [{pipeline_mode = #tpu.pipeline_mode<synchronous>, transform_indices = @transform_0, window_bounds = array<i64: 16, 32>}, {transform_indices = @transform_1, window_bounds = array<i64: 32, 256>}, {transform_indices = @transform_2, window_bounds = array<i64: 16, 256>}]} {
    %c16_i32 = arith.constant 16 : i32
    %0 = arith.muli %arg1, %c16_i32 : i32
    %1 = tpu.assume_multiple %0, 16 : i32
    %2 = arith.index_cast %1 : i32 to index
    %c0 = arith.constant 0 : index
    %3 = vector.load %arg2[%2, %c0] : memref<16x32xbf16, #tpu.memory_space<vmem>>, vector<16x32xbf16>
    %c0_0 = arith.constant 0 : index
    %c0_1 = arith.constant 0 : index
    %4 = vector.load %arg3[%c0_0, %c0_1] : memref<32x256xbf16, #tpu.memory_space<vmem>>, vector<32x256xbf16>
    %cst = arith.constant dense<0.000000e+00> : vector<16x256xf32>
    %5 = tpu.matmul %3, %4, %cst {dimension_numbers = #tpu.dot_dimension_numbers<[1], [0], [0], [1], [0, 0, 1, 1], [], []>} : vector<16x32xbf16>, vector<32x256xbf16>, vector<16x256xf32> -> vector<16x256xf32>
    %c0_2 = arith.constant 0 : index
    %c0_3 = arith.constant 0 : index
    %6 = vector.load %arg4[%c0_2, %c0_3] : memref<16x256xf32, #tpu.memory_space<vmem>>, vector<16x256xf32>
    tpu.vector_store %arg4[%c0_2, %c0_3], %5 {strides = array<i32>} : memref<16x256xf32, #tpu.memory_space<vmem>>, vector<16x256xf32>,
    return
  }
  func.func @transform_0(%arg0: i32, %arg1: i32) -> (i32, i32) {
    %c0_i32 = arith.constant 0 : i32
    %c0_i32_0 = arith.constant 0 : i32
    %c0_i32_1 = arith.constant 0 : i32
    return %c0_i32, %c0_i32_0 : i32, i32
  }
  func.func @transform_1(%arg0: i32, %arg1: i32) -> (i32, i32) {
    %c0_i32 = arith.constant 0 : i32
    %c0_i32_0 = arith.constant 0 : i32
    return %c0_i32, %arg0 : i32, i32
  }
  func.func @transform_2(%arg0: i32, %arg1: i32) -> (i32, i32) {
    %c0_i32 = arith.constant 0 : i32
    return %arg1, %arg0 : i32, i32
  }
}

</mosaic_0001>

<llo_original>
// kernel: lm_head_pallas.1
$region0: #{lm_head_pallas.1}
  #allocation0 [shape = 'u32[]', space=smem, size = 0x4, offset = 0x4, fixed_abs, tag = 'smem constant byte address 0x4 - core index']
  #allocation1 [shape = 'u32[144,128]{1,0:T(1,128)}', space=vmem, size = 0x12000, scoped, tag = 'internal scratch']
  %s0 = inlined_call_operand.vmem [shape: bf16[16,32], index: 0, kind: input, shape index: {}]
  %s1 = inlined_call_operand.hbm [shape: bf16[32,256], index: 1, kind: input, shape index: {}]
  %s2 = inlined_call_operand.hbm [shape: f32[16,256], index: 2, kind: output, shape index: {}]
  %s3 = sld [smem:[#allocation0]]
  $region22: #{lm_head_pallas.1} parent=0
    _
  %s5 = ssub.s32 1, %s3
  %s6 = scalar_select 0, %s5, %s3
  $region1: #{lm_head_pallas.1} parent=0
    #allocation2 [shape = 'u8[16384]{0}', space=vmem, size = 0x4000, scoped, tag = 'input window, operand 1, single buffered']
    #allocation3 [shape = 's32[1]{0}', space=sflag, size = 0x4, scoped, tag = 'scoped memory for lm_head_pallas.1']
    #allocation4 [shape = 's32[1]{0}', space=sflag, size = 0x4, scoped, tag = 'scoped memory for lm_head_pallas.1']
    #allocation5 [shape = 'u8[16384]{0}', space=vmem, size = 0x4000, scoped, tag = 'output window, operand 0, single buffered']
    %7 = vsyncpa [#allocation3], 0
    %8 = vsyncpa [#allocation4], 0
    // Predicated region
    $region2: #{lm_head_pallas.1} parent=1 // pred_check
      _
    $region3: #{lm_head_pallas.1} parent=1 // pred_check_branch
      %10 = sbr.rel (0) target = $region5
    $region4: #{lm_head_pallas.1} parent=1 // pred_region
      _
    $region5: #{lm_head_pallas.1} parent=1 // pred_fallthru
      _
    // Predicated region
    $region6: #{lm_head_pallas.1} parent=1 // pred_check
      _
    $region7: #{lm_head_pallas.1} parent=1 // pred_check_branch
      %12 = sbr.rel (0) target = $region9
    $region8: #{lm_head_pallas.1} parent=1 // pred_region
      %s14 = ssub.s32 512, 512
      %15 = vsyncadd [#allocation3], %s14
      %s16 = sshll.u32 [#allocation2], 4
      %s17 = int_to_ptr.vmem [resolvable:$true] %s16
      %22 = dma.hbm_to_vmem [thread:$0]  %s1, 512, %s17, [#allocation3], 128, 128, 8
    $region9: #{lm_head_pallas.1} parent=1 // pred_fallthru
      _
    // Predicated region
    $region10: #{lm_head_pallas.1} parent=1 // pred_check
      _
    $region11: #{lm_head_pallas.1} parent=1 // pred_check_branch
      %24 = sbr.rel (0) target = $region13
    $region12: #{lm_head_pallas.1} parent=1 // pred_region
      %25 = dma.done [#allocation3], 512
    $region13: #{lm_head_pallas.1} parent=1 // pred_fallthru
      _
    %s27 = smul.u32 0, 16
    %s28 = sshra.s32 %s27, 3
    %s29 = sand.u32 %s27, 7
    %s30 = smul.addr %s28, 4
    %s31 = scalar_lea.vmem %s0, %s30
    %v32 = vld [vmem:[%s31] sm:$0xf]
    %v33 = vld [vmem:[%s31 + $0x4] sm:$0xf]
    %v34 = vld [vmem:[#allocation2] sm:$0xff]
    %v35 = vld [vmem:[#allocation2 + $0x8] sm:$0xff]
    %v36 = vld [vmem:[#allocation2 + $0x10] sm:$0xff]
    %v37 = vld [vmem:[#allocation2 + $0x18] sm:$0xff]
    %v40 = vunpack.c.l.b16 %v32
    %v41 = vunpack.c.l.b16 %v33
    %v42 = vpack.c.b16 %v41, %v40
    %v47 = vunpack.c.l.b16 %v34
    %v48 = vunpack.c.h.b16 %v34
    %v49 = vunpack.c.l.b16 %v35
    %v50 = vunpack.c.h.b16 %v35
    %v51 = vunpack.c.l.b16 %v36
    %v52 = vunpack.c.h.b16 %v36
    %v53 = vunpack.c.l.b16 %v37
    %v54 = vunpack.c.h.b16 %v37
    %v55 = vpack.c.b16 %v49, %v47
    %v56 = vpack.c.b16 %v50, %v48
    %v57 = vpack.c.b16 %v53, %v51
    %v58 = vpack.c.b16 %v54, %v52
    %vm63 = vcmask 261120
    %v65 = vsel %vm63, %v42, 0
    %67 = vmatprep.subr.bf16.mxu0 0
    %68 = vmatpush1.bf16.msra.mxu0 0
    %69 = vmatprep.subr.bf16.mxu0 0
    %70 = vmatpush1.bf16.msra.mxu0 0
    %71 = vmatprep.subr.bf16.mxu0 0
    %72 = vmatpush1.bf16.msra.mxu0 0
    %73 = vmatprep.subr.bf16.mxu0 0
    %74 = vmatpush1.bf16.msra.mxu0 0
    %75 = vmatprep.subr.bf16.mxu0 0
    %76 = vmatpush1.bf16.msra.mxu0 0
    %77 = vmatprep.subr.bf16.mxu0 0
    %78 = vmatpush1.bf16.msra.mxu0 0
    %79 = vmatprep.subr.bf16.mxu0 %v58
    %80 = vmatpush1.bf16.msra.mxu0 %v57
    %81 = vmatprep.subr.bf16.mxu0 %v56
    %82 = vmatpush1.bf16.msra.mxu0 %v55
    %83 = vmatprep.subr.bf16.mxu0 0
    %84 = vmatpush2.bf16.msra.mxu0 0
    %85 = vmatprep.subr.bf16.mxu0 0
    %86 = vmatpush2.bf16.msra.mxu0 0
    %87 = vmatprep.subr.bf16.mxu0 0
    %88 = vmatpush2.bf16.msra.mxu0 0
    %89 = vmatprep.subr.bf16.mxu0 0
    %90 = vmatpush2.bf16.msra.mxu0 0
    %91 = vmatprep.subr.bf16.mxu0 0
    %92 = vmatpush2.bf16.msra.mxu0 0
    %93 = vmatprep.subr.bf16.mxu0 0
    %94 = vmatpush2.bf16.msra.mxu0 0
    %95 = vmatprep.subr.bf16.mxu0 0
    %96 = vmatpush2.bf16.msra.mxu0 0
    %97 = vmatprep.subr.bf16.mxu0 0
    %98 = vmatpush2.bf16.msra.mxu0 0
    %99 = vmatprep.mubr.bf16.mxu0 0
    %100 = vmatmul.mubr.bf16.gmra.mxu0 %v65
    %v101 = vpop.f32.mrf.mxu0
    %v102 = vadd.f32 0.0, %v101
    %v103 = vpop.f32.mrf.mxu0
    %v104 = vadd.f32 0.0, %v103
    %v105 = vpop.f32.mrf.mxu0
    %v106 = vadd.f32 0.0, %v105
    %v107 = vpop.f32.mrf.mxu0
    %v108 = vadd.f32 0.0, %v107
    %109 = vdwg.mxu0
    %110 = vst [vmem:[#allocation5] sm:$0xff] %v102
    %111 = vst [vmem:[#allocation5 + $0x8] sm:$0xff] %v104
    %112 = vst [vmem:[#allocation5 + $0x10] sm:$0xff] %v106
    %113 = vst [vmem:[#allocation5 + $0x18] sm:$0xff] %v108
    // Predicated region
    $region14: #{lm_head_pallas.1} parent=1 // pred_check
      _
    $region15: #{lm_head_pallas.1} parent=1 // pred_check_branch
      %115 = sbr.rel (0) target = $region17
    $region16: #{lm_head_pallas.1} parent=1 // pred_region
      %s117 = ssub.s32 512, 512
      %118 = vsyncadd [#allocation4], %s117
      %s119 = sshll.u32 [#allocation5], 4
      %s120 = int_to_ptr.vmem [resolvable:$true] %s119
      %125 = dma.vmem_to_hbm [thread:$0]  %s120, 512, %s2, [#allocation4], 256, 256, 16
    $region17: #{lm_head_pallas.1} parent=1 // pred_fallthru
      _
    // Predicated region
    $region18: #{lm_head_pallas.1} parent=1 // pred_check
      _
    $region19: #{lm_head_pallas.1} parent=1 // pred_check_branch
      %127 = sbr.rel (0) target = $region21
    $region20: #{lm_head_pallas.1} parent=1 // pred_region
      %128 = dma.done [#allocation4], 512
    $region21: #{lm_head_pallas.1} parent=1 // pred_fallthru
      _
    %129 = vsyncpa [#allocation3], 1
    %130 = vsyncpa [#allocation4], 1

</llo_original>
